<compile_context>
chip_gen: v7x
topology: tpu7x:2x2x1
jax: 0.10.0
libtpu: 0.0.40
codegen_flags: <defaults>
</compile_context>

<pallas_src>
import jax
import jax.numpy as jnp
from jax.experimental import pallas as pl
from jax.experimental.pallas import tpu as pltpu


def _pad8(c):
    return -(-c // 8) * 8


def _gga_kernel(c2_ref,       # SMEM (1,)     : folded conv2-bias + BN2 shift
                x_ref,        # VMEM (Nb,C,T) : in_feat tile (channels on sublanes)
                g_ref,        # VMEM (Nb,1,T) : gate_feat tile
                w1x_ref,      # VMEM (C1, C)  : conv1 weight * bn1_scale, x columns
                w1g_ref,      # VMEM (C1, 1)  : conv1 weight column for the gate channel
                b1_ref,       # VMEM (C1, 1)  : conv1 bias with bn1 shift folded in
                w2_ref,       # VMEM (C1, 1)  : conv2 weight * bn2_scale
                wout_ref,     # VMEM (Cout,C) : out_cov weight (no bias)
                out_ref):     # VMEM (Nb,Cout,T)
    x = x_ref[...]                                   # (Nb, C, T)
    g = g_ref[...]                                   # (Nb, 1, T)
    C = x_ref.shape[1]

    w1x = w1x_ref[...]                               # (C1, C)
    w1g = w1g_ref[...]                               # (C1, 1)
    b1 = b1_ref[...]                                 # (C1, 1)
    w2 = w2_ref[...]                                 # (C1, 1)
    wout = wout_ref[...]                             # (Cout, C)

    # Layer 1 (BN1 + Conv2d(C+1, C+1, 1) folded) + ReLU, as VPU broadcast MACs.
    h = w1g * g + b1                                 # -> (Nb, C1, T)
    for c in range(C):                               # static unroll over tiny C
        h = h + w1x[:, c:c + 1] * x[:, c:c + 1, :]
    h = jnp.maximum(h, 0.0)

    # Layer 2 (Conv2d(C+1, 1, 1) + BN2 folded): weighted sublane reduce.
    s = jnp.sum(w2 * h, axis=1, keepdims=True) + c2_ref[0]     # (Nb, 1, T)

    # Sigmoid gate (exact reciprocal to stay bit-close to the reference).
    attn = pl.reciprocal(1.0 + jnp.exp(-s), approx=False)      # (Nb, 1, T)

    # out_cov fused with the gate: out = (Wout @ x) * (attn + 1).
    z = wout[:, 0:1] * x[:, 0:1, :]                  # (Nb, Cout, T)
    for c in range(1, C):
        z = z + wout[:, c:c + 1] * x[:, c:c + 1, :]
    out_ref[...] = (z * (attn + 1.0)).astype(out_ref.dtype)


def _choose_tiling(N, HW, C, Cout):
    """Pick (Nb, tile, hw_tiles, vmem_limit_bytes) from the chip's VMEM capacity."""
    try:
        vmem_cap = int(pltpu.get_tpu_info().vmem_capacity_bytes)
    except Exception:
        vmem_cap = 64 * 1024 * 1024                  # v7x (smallest) fallback

    # Budget for the double-buffered activation tiles; leave ample headroom.
    budget = min(48 * 1024 * 1024, vmem_cap // 2)
    # f32, double-buffered, sublane-padded rows for x (C), gate (1) and out (Cout).
    per_lane = 2 * (_pad8(C) + _pad8(1) + _pad8(Cout)) * 4
    cap_lanes = max(128, budget // per_lane)

    if HW <= cap_lanes:
        tile = HW
        hw_tiles = 1
        # Batch-block small images to amortize the fixed per-step overhead,
        # but keep >=2 grid steps so both v7x TensorCores stay busy.
        nb_cap = min(max(1, cap_lanes // max(HW, 1)),
                     max(1, N // 2) if N >= 2 else 1,
                     N)
        Nb = 1
        for d in range(nb_cap, 0, -1):
            if N % d == 0:
                Nb = d
                break
        if N // Nb == 1 and hw_tiles == 1 and HW % 256 == 0 and HW >= 256:
            tile = HW // 2                           # single-image: split spatially
            hw_tiles = 2
    else:
        Nb = 1
        t = max(128, (cap_lanes // 128) * 128)
        tile = None
        if HW % 128 == 0:
            tt = t
            while tt >= 128:                         # prefer a tile that divides HW
                if HW % tt == 0:
                    tile = tt
                    break
                tt -= 128
        if tile is None:
            tile = t                                 # ragged last block (masked stores)
        hw_tiles = -(-HW // tile)

    buffers = Nb * per_lane * tile
    vmem_limit = max(32 * 1024 * 1024, buffers + 6 * 1024 * 1024)
    vmem_limit = min(vmem_limit, max(32 * 1024 * 1024, vmem_cap - 8 * 1024 * 1024))
    return Nb, tile, hw_tiles, int(vmem_limit)


def gga_forward(in_feat, gate_feat, params):
    """in_feat: (N, C, H, W) f32, gate_feat: (N, 1, H, W) f32 -> (N, Cout, H, W)."""
    N, C, H, W = in_feat.shape
    HW = H * W
    C1 = C + 1
    Cout = params["wout"].shape[0]

    # Channels-on-sublane, spatial-on-lane: plain reshapes, no transposes, no pad.
    x3 = in_feat.reshape(N, C, HW)
    g3 = gate_feat.reshape(N, 1, HW)

    Nb, tile, hw_tiles, vmem_limit = _choose_tiling(N, HW, C, Cout)
    grid = (N // Nb, hw_tiles)

    row_spec = lambda ch: pl.BlockSpec((Nb, ch, tile), lambda n, j: (n, 0, j))
    w_spec = lambda shp: pl.BlockSpec(shp, lambda n, j: (0, 0))

    out3 = pl.pallas_call(
        _gga_kernel,
        out_shape=jax.ShapeDtypeStruct((N, Cout, HW), jnp.float32),
        grid=grid,
        in_specs=[
            pl.BlockSpec(memory_space=pltpu.MemorySpace.SMEM),   # c2 scalar
            row_spec(C),                                         # x
            row_spec(1),                                         # gate
            w_spec((C1, C)),                                     # w1x
            w_spec((C1, 1)),                                     # w1g
            w_spec((C1, 1)),                                     # b1 (folded)
            w_spec((C1, 1)),                                     # w2 (folded)
            w_spec((Cout, C)),                                   # wout
        ],
        out_specs=row_spec(Cout),
        compiler_params=pltpu.CompilerParams(
            dimension_semantics=("parallel", "parallel"),
            vmem_limit_bytes=vmem_limit),
    )(params["c2"], x3, g3,
      params["w1x"], params["w1g"], params["b1"], params["w2"], params["wout"])

    return out3.reshape(N, Cout, H, W)


def fold_params(p, eps=1e-5):
    """Fold eval-mode BatchNorms into the 1x1 conv weights/biases (kernel params)."""
    C1 = p["w1"].shape[0]
    C = C1 - 1
    # BN1 -> per-channel affine, folded into conv1.
    s1 = p["bn1_gamma"] / jnp.sqrt(p["bn1_var"] + eps)           # (C1,)
    sh1 = p["bn1_beta"] - p["bn1_mean"] * s1                     # (C1,)
    W1f = p["w1"] * s1[None, :]                                  # (C1_out, C1_in)
    b1f = p["w1"] @ sh1 + p["b1"]                                # (C1,)
    # BN2 (1 channel) folded into conv2.
    s2 = p["bn2_gamma"][0] / jnp.sqrt(p["bn2_var"][0] + eps)
    sh2 = p["bn2_beta"][0] - p["bn2_mean"][0] * s2
    w2f = p["w2"][0] * s2                                        # (C1,)
    c2 = p["b2"][0] * s2 + sh2                                   # scalar
    return {
        "w1x": W1f[:, :C].astype(jnp.float32),                   # (C1, C)
        "w1g": W1f[:, C:].astype(jnp.float32),                   # (C1, 1)
        "b1": b1f.reshape(C1, 1).astype(jnp.float32),
        "w2": w2f.reshape(C1, 1).astype(jnp.float32),
        "c2": jnp.reshape(c2, (1,)).astype(jnp.float32),
        "wout": p["wout"].astype(jnp.float32),                   # (Cout, C)
    }


def gga_reference(in_feat, gate_feat, p, eps=1e-5):
    """Pure-JAX reference implementing the original (unfolded) module math in NCHW."""
    xg = jnp.concatenate([in_feat, gate_feat], axis=1)           # (N, C+1, H, W)
    bc = lambda v: v[None, :, None, None]
    s1 = p["bn1_gamma"] / jnp.sqrt(p["bn1_var"] + eps)
    h = (xg - bc(p["bn1_mean"])) * bc(s1) + bc(p["bn1_beta"])
    h = jnp.einsum("oc,nchw->nohw", p["w1"], h) + bc(p["b1"])
    h = jnp.maximum(h, 0.0)
    s = jnp.einsum("oc,nchw->nohw", p["w2"], h) + bc(p["b2"])
    s2 = p["bn2_gamma"] / jnp.sqrt(p["bn2_var"] + eps)
    s = (s - bc(p["bn2_mean"])) * bc(s2) + bc(p["bn2_beta"])
    attn = 1.0 / (1.0 + jnp.exp(-s))
    y = in_feat * (attn + 1.0)
    return jnp.einsum("oc,nchw->nohw", p["wout"], y)


def init_raw_params(key, C, Cout):
    C1 = C + 1
    ks = jax.random.split(key, 9)
    return {
        "bn1_gamma": jax.random.uniform(ks[0], (C1,), minval=0.5, maxval=1.5,
                                        dtype=jnp.float32),
        "bn1_beta": (jax.random.normal(ks[1], (C1,)) * 0.1).astype(jnp.float32),
        "bn1_mean": (jax.random.normal(ks[2], (C1,)) * 0.1).astype(jnp.float32),
        "bn1_var": jax.random.uniform(ks[3], (C1,), minval=0.5, maxval=1.5,
                                      dtype=jnp.float32),
        "w1": (jax.random.normal(ks[4], (C1, C1)) * 0.2).astype(jnp.float32),
        "b1": (jax.random.normal(ks[5], (C1,)) * 0.05).astype(jnp.float32),
        "w2": (jax.random.normal(ks[6], (1, C1)) * 0.2).astype(jnp.float32),
        "b2": (jax.random.normal(ks[7], (1,)) * 0.05).astype(jnp.float32),
        "bn2_gamma": jnp.array([1.1], jnp.float32),
        "bn2_beta": jnp.array([0.05], jnp.float32),
        "bn2_mean": jnp.array([0.02], jnp.float32),
        "bn2_var": jnp.array([0.9], jnp.float32),
        "wout": (jax.random.normal(ks[8], (Cout, C)) * 0.2).astype(jnp.float32),
    }


if __name__ == "__main__":
    key = jax.random.PRNGKey(0)
    k_in, k_gate, k_param = jax.random.split(key, 3)

    N, C, Cout, H, W = 2, 4, 8, 16, 16
    in_feat = jax.random.normal(k_in, (N, C, H, W), dtype=jnp.float32)
    gate_feat = jax.random.normal(k_gate, (N, 1, H, W), dtype=jnp.float32)

    raw = init_raw_params(k_param, C, Cout)
    params = fold_params(raw)

    out = jax.block_until_ready(gga_forward(in_feat, gate_feat, params))
    ref = gga_reference(in_feat, gate_feat, raw)

    assert out.shape == (N, Cout, H, W), out.shape
    max_err = float(jnp.max(jnp.abs(out - ref)))
    assert jnp.allclose(out, ref, atol=1e-4, rtol=1e-4), f"mismatch vs reference: {max_err}"

    print("KERNEL_OK")
</pallas_src>

<mosaic_0001>
module attributes {stable_mosaic.version = 11 : i64} {
  func.func @_gga_kernel(%arg0: i32, %arg1: i32, %arg2: memref<1xf32, #tpu.memory_space<smem>>, %arg3: memref<1x4x256xf32, #tpu.memory_space<vmem>>, %arg4: memref<1x1x256xf32, #tpu.memory_space<vmem>>, %arg5: memref<5x4xf32, #tpu.memory_space<vmem>>, %arg6: memref<5x1xf32, #tpu.memory_space<vmem>>, %arg7: memref<5x1xf32, #tpu.memory_space<vmem>>, %arg8: memref<5x1xf32, #tpu.memory_space<vmem>>, %arg9: memref<8x4xf32, #tpu.memory_space<vmem>>, %arg10: memref<1x8x256xf32, #tpu.memory_space<vmem>>) attributes {dimension_semantics = [#tpu.dimension_semantics<parallel>, #tpu.dimension_semantics<parallel>], iteration_bounds = array<i64: 2, 1>, scalar_prefetch = 0 : i64, scratch_operands = 0 : i64, tpu.core_type = #tpu.core_type<tc>, window_params = [{transform_indices = @transform_0, window_bounds = array<i64: 1>}, {transform_indices = @transform_1, window_bounds = array<i64: 1, 4, 256>}, {transform_indices = @transform_2, window_bounds = array<i64: 1, 1, 256>}, {pipeline_mode = #tpu.pipeline_mode<synchronous>, transform_indices = @transform_3, window_bounds = array<i64: 5, 4>}, {pipeline_mode = #tpu.pipeline_mode<synchronous>, transform_indices = @transform_4, window_bounds = array<i64: 5, 1>}, {pipeline_mode = #tpu.pipeline_mode<synchronous>, transform_indices = @transform_5, window_bounds = array<i64: 5, 1>}, {pipeline_mode = #tpu.pipeline_mode<synchronous>, transform_indices = @transform_6, window_bounds = array<i64: 5, 1>}, {pipeline_mode = #tpu.pipeline_mode<synchronous>, transform_indices = @transform_7, window_bounds = array<i64: 8, 4>}, {transform_indices = @transform_8, window_bounds = array<i64: 1, 8, 256>}]} {
    %c0 = arith.constant 0 : index
    %c0_0 = arith.constant 0 : index
    %c0_1 = arith.constant 0 : index
    %0 = vector.load %arg3[%c0, %c0_0, %c0_1] : memref<1x4x256xf32, #tpu.memory_space<vmem>>, vector<1x4x256xf32>
    %c0_2 = arith.constant 0 : index
    %c0_3 = arith.constant 0 : index
    %c0_4 = arith.constant 0 : index
    %1 = vector.load %arg4[%c0_2, %c0_3, %c0_4] : memref<1x1x256xf32, #tpu.memory_space<vmem>>, vector<1x1x256xf32>
    %c0_5 = arith.constant 0 : index
    %c0_6 = arith.constant 0 : index
    %2 = vector.load %arg5[%c0_5, %c0_6] : memref<5x4xf32, #tpu.memory_space<vmem>>, vector<5x4xf32>
    %c0_7 = arith.constant 0 : index
    %c0_8 = arith.constant 0 : index
    %3 = vector.load %arg6[%c0_7, %c0_8] : memref<5x1xf32, #tpu.memory_space<vmem>>, vector<5x1xf32>
    %c0_9 = arith.constant 0 : index
    %c0_10 = arith.constant 0 : index
    %4 = vector.load %arg7[%c0_9, %c0_10] : memref<5x1xf32, #tpu.memory_space<vmem>>, vector<5x1xf32>
    %c0_11 = arith.constant 0 : index
    %c0_12 = arith.constant 0 : index
    %5 = vector.load %arg8[%c0_11, %c0_12] : memref<5x1xf32, #tpu.memory_space<vmem>>, vector<5x1xf32>
    %c0_13 = arith.constant 0 : index
    %c0_14 = arith.constant 0 : index
    %6 = vector.load %arg9[%c0_13, %c0_14] : memref<8x4xf32, #tpu.memory_space<vmem>>, vector<8x4xf32>
    %7 = vector.shape_cast %3 : vector<5x1xf32> to vector<1x5x1xf32>
    %8 = vector.broadcast %7 : vector<1x5x1xf32> to vector<1x5x256xf32>
    %9 = vector.broadcast %1 : vector<1x1x256xf32> to vector<1x5x256xf32>
    %10 = arith.mulf %8, %9 : vector<1x5x256xf32>
    %11 = vector.shape_cast %4 : vector<5x1xf32> to vector<1x5x1xf32>
    %12 = vector.broadcast %11 : vector<1x5x1xf32> to vector<1x5x256xf32>
    %13 = arith.addf %10, %12 : vector<1x5x256xf32>
    %14 = vector.extract_strided_slice %2 {offsets = [0, 0], sizes = [5, 1], strides = [1, 1]} : vector<5x4xf32> to vector<5x1xf32>
    %15 = vector.extract_strided_slice %0 {offsets = [0, 0, 0], sizes = [1, 1, 256], strides = [1, 1, 1]} : vector<1x4x256xf32> to vector<1x1x256xf32>
    %16 = vector.shape_cast %14 : vector<5x1xf32> to vector<1x5x1xf32>
    %17 = vector.broadcast %16 : vector<1x5x1xf32> to vector<1x5x256xf32>
    %18 = vector.broadcast %15 : vector<1x1x256xf32> to vector<1x5x256xf32>
    %19 = arith.mulf %17, %18 : vector<1x5x256xf32>
    %20 = arith.addf %13, %19 : vector<1x5x256xf32>
    %21 = vector.extract_strided_slice %2 {offsets = [0, 1], sizes = [5, 1], strides = [1, 1]} : vector<5x4xf32> to vector<5x1xf32>
    %22 = vector.extract_strided_slice %0 {offsets = [0, 1, 0], sizes = [1, 1, 256], strides = [1, 1, 1]} : vector<1x4x256xf32> to vector<1x1x256xf32>
    %23 = vector.shape_cast %21 : vector<5x1xf32> to vector<1x5x1xf32>
    %24 = vector.broadcast %23 : vector<1x5x1xf32> to vector<1x5x256xf32>
    %25 = vector.broadcast %22 : vector<1x1x256xf32> to vector<1x5x256xf32>
    %26 = arith.mulf %24, %25 : vector<1x5x256xf32>
    %27 = arith.addf %20, %26 : vector<1x5x256xf32>
    %28 = vector.extract_strided_slice %2 {offsets = [0, 2], sizes = [5, 1], strides = [1, 1]} : vector<5x4xf32> to vector<5x1xf32>
    %29 = vector.extract_strided_slice %0 {offsets = [0, 2, 0], sizes = [1, 1, 256], strides = [1, 1, 1]} : vector<1x4x256xf32> to vector<1x1x256xf32>
    %30 = vector.shape_cast %28 : vector<5x1xf32> to vector<1x5x1xf32>
    %31 = vector.broadcast %30 : vector<1x5x1xf32> to vector<1x5x256xf32>
    %32 = vector.broadcast %29 : vector<1x1x256xf32> to vector<1x5x256xf32>
    %33 = arith.mulf %31, %32 : vector<1x5x256xf32>
    %34 = arith.addf %27, %33 : vector<1x5x256xf32>
    %35 = vector.extract_strided_slice %2 {offsets = [0, 3], sizes = [5, 1], strides = [1, 1]} : vector<5x4xf32> to vector<5x1xf32>
    %36 = vector.extract_strided_slice %0 {offsets = [0, 3, 0], sizes = [1, 1, 256], strides = [1, 1, 1]} : vector<1x4x256xf32> to vector<1x1x256xf32>
    %37 = vector.shape_cast %35 : vector<5x1xf32> to vector<1x5x1xf32>
    %38 = vector.broadcast %37 : vector<1x5x1xf32> to vector<1x5x256xf32>
    %39 = vector.broadcast %36 : vector<1x1x256xf32> to vector<1x5x256xf32>
    %40 = arith.mulf %38, %39 : vector<1x5x256xf32>
    %41 = arith.addf %34, %40 : vector<1x5x256xf32>
    %cst = arith.constant 0.000000e+00 : f32
    %42 = vector.broadcast %cst : f32 to vector<1x5x256xf32>
    %43 = arith.maximumf %41, %42 : vector<1x5x256xf32>
    %44 = vector.shape_cast %5 : vector<5x1xf32> to vector<1x5x1xf32>
    %45 = vector.broadcast %44 : vector<1x5x1xf32> to vector<1x5x256xf32>
    %46 = arith.mulf %45, %43 : vector<1x5x256xf32>
    %cst_15 = arith.constant dense<0.000000e+00> : vector<1x256xf32>
    %47 = vector.multi_reduction <add>, %46, %cst_15 [1] : vector<1x5x256xf32> to vector<1x256xf32>
    %48 = vector.shape_cast %47 : vector<1x256xf32> to vector<1x1x256xf32>
    %c0_16 = arith.constant 0 : index
    %49 = memref.load %arg2[%c0_16] : memref<1xf32, #tpu.memory_space<smem>>
    %50 = vector.broadcast %49 : f32 to vector<1x1x256xf32>
    %51 = arith.addf %48, %50 : vector<1x1x256xf32>
    %cst_17 = arith.constant 0.000000e+00 : f32
    %52 = vector.broadcast %cst_17 : f32 to vector<1x1x256xf32>
    %53 = arith.subf %52, %51 : vector<1x1x256xf32>
    %54 = math.exp %53 : vector<1x1x256xf32>
    %cst_18 = arith.constant 1.000000e+00 : f32
    %55 = vector.broadcast %cst_18 : f32 to vector<1x1x256xf32>
    %56 = arith.addf %55, %54 : vector<1x1x256xf32>
    %57 = tpu.reciprocal %56 : vector<1x1x256xf32> -> vector<1x1x256xf32>
    %58 = vector.extract_strided_slice %6 {offsets = [0, 0], sizes = [8, 1], strides = [1, 1]} : vector<8x4xf32> to vector<8x1xf32>
    %59 = vector.extract_strided_slice %0 {offsets = [0, 0, 0], sizes = [1, 1, 256], strides = [1, 1, 1]} : vector<1x4x256xf32> to vector<1x1x256xf32>
    %60 = vector.shape_cast %58 : vector<8x1xf32> to vector<1x8x1xf32>
    %61 = vector.broadcast %60 : vector<1x8x1xf32> to vector<1x8x256xf32>
    %62 = vector.broadcast %59 : vector<1x1x256xf32> to vector<1x8x256xf32>
    %63 = arith.mulf %61, %62 : vector<1x8x256xf32>
    %64 = vector.extract_strided_slice %6 {offsets = [0, 1], sizes = [8, 1], strides = [1, 1]} : vector<8x4xf32> to vector<8x1xf32>
    %65 = vector.extract_strided_slice %0 {offsets = [0, 1, 0], sizes = [1, 1, 256], strides = [1, 1, 1]} : vector<1x4x256xf32> to vector<1x1x256xf32>
    %66 = vector.shape_cast %64 : vector<8x1xf32> to vector<1x8x1xf32>
    %67 = vector.broadcast %66 : vector<1x8x1xf32> to vector<1x8x256xf32>
    %68 = vector.broadcast %65 : vector<1x1x256xf32> to vector<1x8x256xf32>
    %69 = arith.mulf %67, %68 : vector<1x8x256xf32>
    %70 = arith.addf %63, %69 : vector<1x8x256xf32>
    %71 = vector.extract_strided_slice %6 {offsets = [0, 2], sizes = [8, 1], strides = [1, 1]} : vector<8x4xf32> to vector<8x1xf32>
    %72 = vector.extract_strided_slice %0 {offsets = [0, 2, 0], sizes = [1, 1, 256], strides = [1, 1, 1]} : vector<1x4x256xf32> to vector<1x1x256xf32>
    %73 = vector.shape_cast %71 : vector<8x1xf32> to vector<1x8x1xf32>
    %74 = vector.broadcast %73 : vector<1x8x1xf32> to vector<1x8x256xf32>
    %75 = vector.broadcast %72 : vector<1x1x256xf32> to vector<1x8x256xf32>
    %76 = arith.mulf %74, %75 : vector<1x8x256xf32>
    %77 = arith.addf %70, %76 : vector<1x8x256xf32>
    %78 = vector.extract_strided_slice %6 {offsets = [0, 3], sizes = [8, 1], strides = [1, 1]} : vector<8x4xf32> to vector<8x1xf32>
    %79 = vector.extract_strided_slice %0 {offsets = [0, 3, 0], sizes = [1, 1, 256], strides = [1, 1, 1]} : vector<1x4x256xf32> to vector<1x1x256xf32>
    %80 = vector.shape_cast %78 : vector<8x1xf32> to vector<1x8x1xf32>
    %81 = vector.broadcast %80 : vector<1x8x1xf32> to vector<1x8x256xf32>
    %82 = vector.broadcast %79 : vector<1x1x256xf32> to vector<1x8x256xf32>
    %83 = arith.mulf %81, %82 : vector<1x8x256xf32>
    %84 = arith.addf %77, %83 : vector<1x8x256xf32>
    %cst_19 = arith.constant 1.000000e+00 : f32
    %85 = vector.broadcast %cst_19 : f32 to vector<1x1x256xf32>
    %86 = arith.addf %57, %85 : vector<1x1x256xf32>
    %87 = vector.broadcast %86 : vector<1x1x256xf32> to vector<1x8x256xf32>
    %88 = arith.mulf %84, %87 : vector<1x8x256xf32>
    %c0_20 = arith.constant 0 : index
    %c0_21 = arith.constant 0 : index
    %c0_22 = arith.constant 0 : index
    %89 = vector.load %arg10[%c0_20, %c0_21, %c0_22] : memref<1x8x256xf32, #tpu.memory_space<vmem>>, vector<1x8x256xf32>
    tpu.vector_store %arg10[%c0_20, %c0_21, %c0_22], %88 {strides = array<i32>} : memref<1x8x256xf32, #tpu.memory_space<vmem>>, vector<1x8x256xf32>,
    return
  }
  func.func @transform_0(%arg0: i32, %arg1: i32) -> i32 {
    %c0_i32 = arith.constant 0 : i32
    %c0_i32_0 = arith.constant 0 : i32
    return %c0_i32 : i32
  }
  func.func @transform_1(%arg0: i32, %arg1: i32) -> (i32, i32, i32) {
    %c0_i32 = arith.constant 0 : i32
    %c0_i32_0 = arith.constant 0 : i32
    return %arg0, %c0_i32, %arg1 : i32, i32, i32
  }
  func.func @transform_2(%arg0: i32, %arg1: i32) -> (i32, i32, i32) {
    %c0_i32 = arith.constant 0 : i32
    %c0_i32_0 = arith.constant 0 : i32
    return %arg0, %c0_i32, %arg1 : i32, i32, i32
  }
  func.func @transform_3(%arg0: i32, %arg1: i32) -> (i32, i32) {
    %c0_i32 = arith.constant 0 : i32
    %c0_i32_0 = arith.constant 0 : i32
    %c0_i32_1 = arith.constant 0 : i32
    return %c0_i32, %c0_i32_0 : i32, i32
  }
  func.func @transform_4(%arg0: i32, %arg1: i32) -> (i32, i32) {
    %c0_i32 = arith.constant 0 : i32
    %c0_i32_0 = arith.constant 0 : i32
    %c0_i32_1 = arith.constant 0 : i32
    return %c0_i32, %c0_i32_0 : i32, i32
  }
  func.func @transform_5(%arg0: i32, %arg1: i32) -> (i32, i32) {
    %c0_i32 = arith.constant 0 : i32
    %c0_i32_0 = arith.constant 0 : i32
    %c0_i32_1 = arith.constant 0 : i32
    return %c0_i32, %c0_i32_0 : i32, i32
  }
  func.func @transform_6(%arg0: i32, %arg1: i32) -> (i32, i32) {
    %c0_i32 = arith.constant 0 : i32
    %c0_i32_0 = arith.constant 0 : i32
    %c0_i32_1 = arith.constant 0 : i32
    return %c0_i32, %c0_i32_0 : i32, i32
  }
  func.func @transform_7(%arg0: i32, %arg1: i32) -> (i32, i32) {
    %c0_i32 = arith.constant 0 : i32
    %c0_i32_0 = arith.constant 0 : i32
    %c0_i32_1 = arith.constant 0 : i32
    return %c0_i32, %c0_i32_0 : i32, i32
  }
  func.func @transform_8(%arg0: i32, %arg1: i32) -> (i32, i32, i32) {
    %c0_i32 = arith.constant 0 : i32
    %c0_i32_0 = arith.constant 0 : i32
    return %arg0, %c0_i32, %arg1 : i32, i32, i32
  }
}

</mosaic_0001>

<llo_original>
// kernel: tpu_custom_call.1
$region0: #{tpu_custom_call.1}
  #allocation0 [shape = 'u32[]', space=smem, size = 0x4, offset = 0x4, fixed_abs, tag = 'smem constant byte address 0x4 - core index']
  #allocation1 [shape = 'u32[144,128]{1,0:T(1,128)}', space=vmem, size = 0x12000, scoped, tag = 'internal scratch']
  #allocation2 [shape = 'f32[1]{0:T(128)S(6)}', space=smem, size = 0x200, scoped, tag = 'scoped memory for tpu_custom_call.1']
  %s0 = inlined_call_operand.<no memory space> [shape: f32[1], index: 0, kind: input, shape index: {}]
  %s1 = inlined_call_operand.vmem [shape: f32[2,4,256], index: 1, kind: input, shape index: {}]
  %s2 = inlined_call_operand.vmem [shape: f32[2,1,256], index: 2, kind: input, shape index: {}]
  %s3 = inlined_call_operand.vmem [shape: f32[5,4], index: 3, kind: input, shape index: {}]
  %s4 = inlined_call_operand.vmem [shape: f32[5,1], index: 4, kind: input, shape index: {}]
  %s5 = inlined_call_operand.vmem [shape: f32[5,1], index: 5, kind: input, shape index: {}]
  %s6 = inlined_call_operand.vmem [shape: f32[5,1], index: 6, kind: input, shape index: {}]
  %s7 = inlined_call_operand.vmem [shape: f32[8,4], index: 7, kind: input, shape index: {}]
  %s8 = inlined_call_operand.hbm [shape: f32[2,8,256], index: 8, kind: output, shape index: {}]
  %s9 = sld [smem:[#allocation0]]
  $region65: #{tpu_custom_call.1} parent=0
    _
  %s11 = ssub.s32 1, %s9
  %s12 = scalar_select 0, %s11, %s9
  %13 = sst [smem:[#allocation2]] %s0
  $region1: #{tpu_custom_call.1} parent=0
    #allocation3 [shape = 'u8[16384]{0}', space=vmem, size = 0x4000, scoped, tag = 'output window, operand 0']
    #allocation4 [shape = 's32[2]{0}', space=sflag, size = 0x8, scoped, tag = 'scoped memory for tpu_custom_call.1']
    %14 = vsyncpa [#allocation4], 0
    %s15 = scalar_lea.sflag [#allocation4], 1
    %16 = vsyncpa %s15, 0
    loop: start=0, step=1, limit=4
    $region2: #{tpu_custom_call.1} parent=1 // loop_pre_header
      _
    $region3: #{tpu_custom_call.1} parent=1 // loop_header
      %s18 = sphi 0, %s22
      %p19 = scmp.ge.s32.totalorder %s18, 4
      %s25 = sphi 0, %s37
      %s26 = sphi 0, %s33
      %s27 = sphi 0, %s25
      %s28 = sphi 0, %s26
      %s29 = sphi 0, %s27
      %s30 = sphi 0, %s28
      %s38 = sphi 0, %s38
      %s40 = sphi 0, %s38
      %s41 = sphi 0, %s40
      %s55 = sphi 0, %s41
      %s63 = sphi 0, %s65
      %s66 = sphi 0, %s63
      %s67 = sphi 0, %s66
      %s83 = sphi 0, %s67
      %s91 = sphi 0, %s93
      %s94 = sphi 0, %s91
      %s95 = sphi 0, %s94
      %s111 = sphi 0, %s95
      %s115 = sphi 0, %s115
      %s117 = sphi 0, %s115
      %s118 = sphi 0, %s117
      %s132 = sphi 0, %s118
      %s136 = sphi 0, %s136
      %s138 = sphi 0, %s136
      %s139 = sphi 0, %s138
      %s153 = sphi 0, %s139
      %s157 = sphi 0, %s157
      %s159 = sphi 0, %s157
      %s160 = sphi 0, %s159
      %s174 = sphi 0, %s160
      %s178 = sphi 0, %s178
      %s180 = sphi 0, %s178
      %s181 = sphi 0, %s180
      %s195 = sphi 0, %s181
      %s199 = sphi 0, %s199
      %s201 = sphi 0, %s199
      %s202 = sphi 0, %s201
      %s216 = sphi 0, %s202
      %s224 = sphi 0, %s226
      %s227 = sphi 0, %s224
      %s228 = sphi 0, %s227
      %s244 = sphi 0, %s228
    $region4: #{tpu_custom_call.1} parent=1 // loop_header_branch
      %21 = sbr.rel (%p19) target = $region8
    $region5: #{tpu_custom_call.1} parent=1 // loop_body
      %s23 = ssub.s32 %s18, 1
      %s24 = ssub.s32 %s18, 2
      %s31 = sadd.s32 1, %s26
      %p32 = scmp.ge.s32.totalorder %s31, 1
      %s33 = scalar_select %p32, 0, %s31
      %s34 = sadd.s32 1, %s25
      %s35 = scalar_select %p32, %s34, %s25
      %p36 = scmp.ge.s32.totalorder %s35, 2
      %s37 = scalar_select %p36, 0, %s35
      %s39 = sadd.s32 %s38, 1
      %p42 = scmp.eq.s32.totalorder %s18, 1
      %p43 = scmp.ne.s32.totalorder %s38, %s40
      %p44 = scmp.eq.s32.totalorder %s18, 0
      %p45 = por %p43, %p44
      %p46 = scmp.ne.s32.totalorder %s38, %s40
      %p47 = scmp.eq.s32.totalorder %s23, 1
      %p48 = por %p46, %p47
      %p49 = scmp.ne.s32.totalorder %s40, %s41
      %p50 = scmp.eq.s32.totalorder %s23, 0
      %p51 = por %p49, %p50
      %p52 = scmp.ne.s32.totalorder %s40, %s41
      %p53 = scmp.eq.s32.totalorder %s24, 1
      %p54 = por %p52, %p53
      %p56 = scmp.ne.s32.totalorder %s41, %s55
      %p57 = scmp.eq.s32.totalorder %s24, 0
      %p58 = por %p56, %p57
      %s59 = ssub.s32 %s25, %s37
      %s60 = ssub.s32 %s26, %s33
      %s61 = sor.u32 %s59, %s60
      %p62 = scmp.eq.s32.totalorder %s61, 0
      %s64 = sadd.s32 %s63, 1
      %s65 = scalar_select %p62, %s63, %s64
      %p68 = pneg %p62
      %p69 = scmp.eq.s32.totalorder %s18, 1
      %p70 = por %p68, %p69
      %p71 = scmp.ne.s32.totalorder %s63, %s66
      %p72 = scmp.eq.s32.totalorder %s18, 0
      %p73 = por %p71, %p72
      %p74 = scmp.ne.s32.totalorder %s63, %s66
      %p75 = scmp.eq.s32.totalorder %s23, 1
      %p76 = por %p74, %p75
      %p77 = scmp.ne.s32.totalorder %s66, %s67
      %p78 = scmp.eq.s32.totalorder %s23, 0
      %p79 = por %p77, %p78
      %p80 = scmp.ne.s32.totalorder %s66, %s67
      %p81 = scmp.eq.s32.totalorder %s24, 1
      %p82 = por %p80, %p81
      %p84 = scmp.ne.s32.totalorder %s67, %s83
      %p85 = scmp.eq.s32.totalorder %s24, 0
      %p86 = por %p84, %p85
      %s87 = ssub.s32 %s25, %s37
      %s88 = ssub.s32 %s26, %s33
      %s89 = sor.u32 %s87, %s88
      %p90 = scmp.eq.s32.totalorder %s89, 0
      %s92 = sadd.s32 %s91, 1
      %s93 = scalar_select %p90, %s91, %s92
      %p96 = pneg %p90
      %p97 = scmp.eq.s32.totalorder %s18, 1
      %p98 = por %p96, %p97
      %p99 = scmp.ne.s32.totalorder %s91, %s94
      %p100 = scmp.eq.s32.totalorder %s18, 0
      %p101 = por %p99, %p100
      %p102 = scmp.ne.s32.totalorder %s91, %s94
      %p103 = scmp.eq.s32.totalorder %s23, 1
      %p104 = por %p102, %p103
      %p105 = scmp.ne.s32.totalorder %s94, %s95
      %p106 = scmp.eq.s32.totalorder %s23, 0
      %p107 = por %p105, %p106
      %p108 = scmp.ne.s32.totalorder %s94, %s95
      %p109 = scmp.eq.s32.totalorder %s24, 1
      %p110 = por %p108, %p109
      %p112 = scmp.ne.s32.totalorder %s95, %s111
      %p113 = scmp.eq.s32.totalorder %s24, 0
      %p114 = por %p112, %p113
      %s116 = sadd.s32 %s115, 1
      %p119 = scmp.eq.s32.totalorder %s18, 1
      %p120 = scmp.ne.s32.totalorder %s115, %s117
      %p121 = scmp.eq.s32.totalorder %s18, 0
      %p122 = por %p120, %p121
      %p123 = scmp.ne.s32.totalorder %s115, %s117
      %p124 = scmp.eq.s32.totalorder %s23, 1
      %p125 = por %p123, %p124
      %p126 = scmp.ne.s32.totalorder %s117, %s118
      %p127 = scmp.eq.s32.totalorder %s23, 0
      %p128 = por %p126, %p127
      %p129 = scmp.ne.s32.totalorder %s117, %s118
      %p130 = scmp.eq.s32.totalorder %s24, 1
      %p131 = por %p129, %p130
      %p133 = scmp.ne.s32.totalorder %s118, %s132
      %p134 = scmp.eq.s32.totalorder %s24, 0
      %p135 = por %p133, %p134
      %s137 = sadd.s32 %s136, 1
      %p140 = scmp.eq.s32.totalorder %s18, 1
      %p141 = scmp.ne.s32.totalorder %s136, %s138
      %p142 = scmp.eq.s32.totalorder %s18, 0
      %p143 = por %p141, %p142
      %p144 = scmp.ne.s32.totalorder %s136, %s138
      %p145 = scmp.eq.s32.totalorder %s23, 1
      %p146 = por %p144, %p145
      %p147 = scmp.ne.s32.totalorder %s138, %s139
      %p148 = scmp.eq.s32.totalorder %s23, 0
      %p149 = por %p147, %p148
      %p150 = scmp.ne.s32.totalorder %s138, %s139
      %p151 = scmp.eq.s32.totalorder %s24, 1
      %p152 = por %p150, %p151
      %p154 = scmp.ne.s32.totalorder %s139, %s153
      %p155 = scmp.eq.s32.totalorder %s24, 0
      %p156 = por %p154, %p155
      %s158 = sadd.s32 %s157, 1
      %p161 = scmp.eq.s32.totalorder %s18, 1
      %p162 = scmp.ne.s32.totalorder %s157, %s159
      %p163 = scmp.eq.s32.totalorder %s18, 0
      %p164 = por %p162, %p163
      %p165 = scmp.ne.s32.totalorder %s157, %s159
      %p166 = scmp.eq.s32.totalorder %s23, 1
      %p167 = por %p165, %p166
      %p168 = scmp.ne.s32.totalorder %s159, %s160
      %p169 = scmp.eq.s32.totalorder %s23, 0
      %p170 = por %p168, %p169
      %p171 = scmp.ne.s32.totalorder %s159, %s160
      %p172 = scmp.eq.s32.totalorder %s24, 1
      %p173 = por %p171, %p172
      %p175 = scmp.ne.s32.totalorder %s160, %s174
      %p176 = scmp.eq.s32.totalorder %s24, 0
      %p177 = por %p175, %p176
      %s179 = sadd.s32 %s178, 1
      %p182 = scmp.eq.s32.totalorder %s18, 1
      %p183 = scmp.ne.s32.totalorder %s178, %s180
      %p184 = scmp.eq.s32.totalorder %s18, 0
      %p185 = por %p183, %p184
      %p186 = scmp.ne.s32.totalorder %s178, %s180
      %p187 = scmp.eq.s32.totalorder %s23, 1
      %p188 = por %p186, %p187
      %p189 = scmp.ne.s32.totalorder %s180, %s181
      %p190 = scmp.eq.s32.totalorder %s23, 0
      %p191 = por %p189, %p190
      %p192 = scmp.ne.s32.totalorder %s180, %s181
      %p193 = scmp.eq.s32.totalorder %s24, 1
      %p194 = por %p192, %p193
      %p196 = scmp.ne.s32.totalorder %s181, %s195
      %p197 = scmp.eq.s32.totalorder %s24, 0
      %p198 = por %p196, %p197
      %s200 = sadd.s32 %s199, 1
      %p203 = scmp.eq.s32.totalorder %s18, 1
      %p204 = scmp.ne.s32.totalorder %s199, %s201
      %p205 = scmp.eq.s32.totalorder %s18, 0
      %p206 = por %p204, %p205
      %p207 = scmp.ne.s32.totalorder %s199, %s201
      %p208 = scmp.eq.s32.totalorder %s23, 1
      %p209 = por %p207, %p208
      %p210 = scmp.ne.s32.totalorder %s201, %s202
      %p211 = scmp.eq.s32.totalorder %s23, 0
      %p212 = por %p210, %p211
      %p213 = scmp.ne.s32.totalorder %s201, %s202
      %p214 = scmp.eq.s32.totalorder %s24, 1
      %p215 = por %p213, %p214
      %p217 = scmp.ne.s32.totalorder %s202, %s216
      %p218 = scmp.eq.s32.totalorder %s24, 0
      %p219 = por %p217, %p218
      %s220 = ssub.s32 %s25, %s37
      %s221 = ssub.s32 %s26, %s33
      %s222 = sor.u32 %s220, %s221
      %p223 = scmp.eq.s32.totalorder %s222, 0
      %s225 = sadd.s32 %s224, 1
      %s226 = scalar_select %p223, %s224, %s225
      %p229 = pneg %p223
      %p230 = scmp.eq.s32.totalorder %s18, 1
      %p231 = por %p229, %p230
      %p232 = scmp.ne.s32.totalorder %s224, %s227
      %p233 = scmp.eq.s32.totalorder %s18, 0
      %p234 = por %p232, %p233
      %p235 = scmp.ne.s32.totalorder %s224, %s227
      %p236 = scmp.eq.s32.totalorder %s23, 1
      %p237 = por %p235, %p236
      %p238 = scmp.ne.s32.totalorder %s227, %s228
      %p239 = scmp.eq.s32.totalorder %s23, 0
      %p240 = por %p238, %p239
      %p241 = scmp.ne.s32.totalorder %s227, %s228
      %p242 = scmp.eq.s32.totalorder %s24, 1
      %p243 = por %p241, %p242
      %p245 = scmp.ne.s32.totalorder %s228, %s244
      %p246 = scmp.eq.s32.totalorder %s24, 0
      %p247 = por %p245, %p246
      %p248 = scmp.le.s32.totalorder 1, %s18
      %p249 = scmp.lt.s32.totalorder %s18, 3
      %p250 = pnand %p248, %p249
      %p251 = pneg %p250
      // Predicated region
      $region9: #{tpu_custom_call.1} parent=5 // pred_check
        _
      $region10: #{tpu_custom_call.1} parent=5 // pred_check_branch
        %253 = sbr.rel (%p250) target = $region12
      $region11: #{tpu_custom_call.1} parent=5 // pred_region
        %s254 = ssub.s32 %s18, 1
        // Predicated region
        $region13: #{tpu_custom_call.1} parent=11 // pred_check
          %p255 = pneg %p51
        $region14: #{tpu_custom_call.1} parent=11 // pred_check_branch
          %257 = sbr.rel (%p255) target = $region16
        $region15: #{tpu_custom_call.1} parent=11 // pred_region
          _
        $region16: #{tpu_custom_call.1} parent=11 // pred_fallthru
          _
        // Predicated region
        $region17: #{tpu_custom_call.1} parent=11 // pred_check
          %p258 = pneg %p128
        $region18: #{tpu_custom_call.1} parent=11 // pred_check_branch
          %260 = sbr.rel (%p258) target = $region20
        $region19: #{tpu_custom_call.1} parent=11 // pred_region
          _
        $region20: #{tpu_custom_call.1} parent=11 // pred_fallthru
          _
        // Predicated region
        $region21: #{tpu_custom_call.1} parent=11 // pred_check
          %p261 = pneg %p149
        $region22: #{tpu_custom_call.1} parent=11 // pred_check_branch
          %263 = sbr.rel (%p261) target = $region24
        $region23: #{tpu_custom_call.1} parent=11 // pred_region
          _
        $region24: #{tpu_custom_call.1} parent=11 // pred_fallthru
          _
        // Predicated region
        $region25: #{tpu_custom_call.1} parent=11 // pred_check
          %p264 = pneg %p170
        $region26: #{tpu_custom_call.1} parent=11 // pred_check_branch
          %266 = sbr.rel (%p264) target = $region28
        $region27: #{tpu_custom_call.1} parent=11 // pred_region
          _
        $region28: #{tpu_custom_call.1} parent=11 // pred_fallthru
          _
        // Predicated region
        $region29: #{tpu_custom_call.1} parent=11 // pred_check
          %p267 = pneg %p191
        $region30: #{tpu_custom_call.1} parent=11 // pred_check_branch
          %269 = sbr.rel (%p267) target = $region32
        $region31: #{tpu_custom_call.1} parent=11 // pred_region
          _
        $region32: #{tpu_custom_call.1} parent=11 // pred_fallthru
          _
        // Predicated region
        $region33: #{tpu_custom_call.1} parent=11 // pred_check
          %p270 = pneg %p212
        $region34: #{tpu_custom_call.1} parent=11 // pred_check_branch
          %272 = sbr.rel (%p270) target = $region36
        $region35: #{tpu_custom_call.1} parent=11 // pred_region
          _
        $region36: #{tpu_custom_call.1} parent=11 // pred_fallthru
          _
      $region12: #{tpu_custom_call.1} parent=5 // pred_fallthru
        _
      %p273 = scmp.lt.s32.totalorder %s18, 2
      // Predicated region
      $region37: #{tpu_custom_call.1} parent=5 // pred_check
        %p274 = pneg %p273
      $region38: #{tpu_custom_call.1} parent=5 // pred_check_branch
        %276 = sbr.rel (%p274) target = $region40
      $region39: #{tpu_custom_call.1} parent=5 // pred_region
        // Predicated region
        $region41: #{tpu_custom_call.1} parent=39 // pred_check
          %p277 = pneg %p73
        $region42: #{tpu_custom_call.1} parent=39 // pred_check_branch
          %279 = sbr.rel (%p277) target = $region44
        $region43: #{tpu_custom_call.1} parent=39 // pred_region
          %s280 = smul.u32 2, %s26
          %p281 = scmp.lt.s32.totalorder %s25, 1
          %s282 = scalar_select %p281, %s25, 1
          %p283 = scmp.lt.s32.totalorder %s280, 1
          %s284 = scalar_select %p283, %s280, 1
          %s285 = smul.addr %s282, 2
          %s286 = sadd.s32 %s284, %s285
          %s287 = smul.addr %s286, 4
          %s288 = scalar_lea.vmem %s1, %s287
          %s289 = smul.u32 2, %s26
        $region44: #{tpu_custom_call.1} parent=39 // pred_fallthru
          _
        // Predicated region
        $region45: #{tpu_custom_call.1} parent=39 // pred_check
          %p290 = pneg %p101
        $region46: #{tpu_custom_call.1} parent=39 // pred_check_branch
          %292 = sbr.rel (%p290) target = $region48
        $region47: #{tpu_custom_call.1} parent=39 // pred_region
          %s293 = smul.u32 2, %s26
          %p294 = scmp.lt.s32.totalorder %s25, 1
          %s295 = scalar_select %p294, %s25, 1
          %p296 = scmp.lt.s32.totalorder %s293, 1
          %s297 = scalar_select %p296, %s293, 1
          %s298 = smul.addr %s295, 2
          %s299 = sadd.s32 %s297, %s298
          %s300 = scalar_lea.vmem %s2, %s299
          %s301 = smul.u32 2, %s26
        $region48: #{tpu_custom_call.1} parent=39 // pred_fallthru
          _
      $region40: #{tpu_custom_call.1} parent=5 // pred_fallthru
        _
      %p302 = scmp.le.s32.totalorder 1, %s18
      %p303 = scmp.lt.s32.totalorder %s18, 3
      %p304 = pnand %p302, %p303
      %p305 = pneg %p304
      // Predicated region
      $region49: #{tpu_custom_call.1} parent=5 // pred_check
        _
      $region50: #{tpu_custom_call.1} parent=5 // pred_check_branch
        %307 = sbr.rel (%p304) target = $region52
      $region51: #{tpu_custom_call.1} parent=5 // pred_region
        %s308 = ssub.s32 %s18, 1
        %p309 = pneg %p51
        %p310 = pneg %p48
        %s311 = smul.u32 2, %s28
        %p312 = scmp.lt.s32.totalorder %s27, 1
        %s313 = scalar_select %p312, %s27, 1
        %p314 = scmp.lt.s32.totalorder %s311, 1
        %s315 = scalar_select %p314, %s311, 1
        %s316 = smul.addr %s313, 2
        %s317 = sadd.s32 %s315, %s316
        %s318 = smul.addr %s317, 4
        %s319 = scalar_lea.vmem %s1, %s318
        %p320 = pneg %p79
        %p321 = pneg %p76
        %s322 = smul.u32 2, %s28
        %p323 = scmp.lt.s32.totalorder %s27, 1
        %s324 = scalar_select %p323, %s27, 1
        %p325 = scmp.lt.s32.totalorder %s322, 1
        %s326 = scalar_select %p325, %s322, 1
        %s327 = smul.addr %s324, 2
        %s328 = sadd.s32 %s326, %s327
        %s329 = scalar_lea.vmem %s2, %s328
        %p330 = pneg %p107
        %p331 = pneg %p104
        %p332 = pneg %p128
        %p333 = pneg %p125
        %p334 = pneg %p149
        %p335 = pneg %p146
        %p336 = pneg %p170
        %p337 = pneg %p167
        %p338 = pneg %p191
        %p339 = pneg %p188
        %p340 = pneg %p212
        %p341 = pneg %p209
        %p342 = pneg %p240
        %p343 = pneg %p237
        %s344 = sand.u32 %s227, 1
        %s345 = scalar_lea.sflag [#allocation4], %s344
        %s346 = sand.u32 %s227, 1
        %s347 = smul.addr %s346, 16
        %s348 = scalar_lea.vmem [#allocation3], %s347
        %s349 = smul.u32 2, %s28
        %p350 = scmp.lt.s32.totalorder %s27, 1
        %s351 = scalar_select %p350, %s27, 1
        %p352 = scmp.lt.s32.totalorder %s349, 1
        %s353 = scalar_select %p352, %s349, 1
        %s354 = smul.addr %s351, 2
        %s355 = sadd.s32 %s353, %s354
        %s356 = smul.addr %s355, 4
        %s357 = scalar_lea.vmem %s1, %s356
        %s358 = smul.u32 2, %s28
        %s359 = smul.u32 2, %s28
        %p360 = scmp.lt.s32.totalorder %s27, 1
        %s361 = scalar_select %p360, %s27, 1
        %p362 = scmp.lt.s32.totalorder %s359, 1
        %s363 = scalar_select %p362, %s359, 1
        %s364 = smul.addr %s361, 2
        %s365 = sadd.s32 %s363, %s364
        %s366 = scalar_lea.vmem %s2, %s365
        %s367 = smul.u32 2, %s28
        %s368 = smul.u32 2, %s28
        %v369 = vld [vmem:[%s357] sm:$0xff]
        %v370 = vld [vmem:[%s366] sm:$0x3]
        %v371 = vld [vmem:[%s3] sm:$0x1f]
        %v372 = vld [vmem:[%s4] sm:$0x1f]
        %v373 = vld [vmem:[%s5] sm:$0x1f]
        %v374 = vld [vmem:[%s6] sm:$0x1f]
        %v375 = vld [vmem:[%s7] sm:$0xff]
        %377 = vset.pattern.permute.xlu0 0
        %378 = vperm.xlu0 %377, %v372
        %v379 = vpop.permute.xlu0 %378
        %v382 = vlaneseq
        %v383 = vshrl.u32 %v382, 7
        %v384 = vsub.s32 0, %v383
        %v385 = vrot.slane %v370, %v384
        %v386 = vlaneseq
        %v387 = vshrl.u32 %v386, 7
        %v388 = vsub.s32 1, %v387
        %v389 = vrot.slane %v370, %v388
        %v392 = vmul.f32 %v379, %v385
        %v393 = vmul.f32 %v379, %v389
        %395 = vset.pattern.permute.xlu0 0
        %396 = vperm.xlu0 %395, %v373
        %v397 = vpop.permute.xlu0 %396
        %v399 = vadd.f32 %v392, %v397
        %v400 = vadd.f32 %v393, %v397
        %402 = vset.pattern.permute.xlu0 0
        %403 = vperm.xlu0 %402, %v371
        %v404 = vpop.permute.xlu0 %403
        %v407 = vlaneseq
        %v408 = vshrl.u32 %v407, 7
        %v409 = vsub.s32 0, %v408
        %v410 = vrot.slane %v369, %v409
        %v411 = vlaneseq
        %v412 = vshrl.u32 %v411, 7
        %v413 = vsub.s32 4, %v412
        %v414 = vrot.slane %v369, %v413
        %v417 = vlaneseq
        %v418 = vshrl.u32 %v417, 7
        %v419 = vsub.s32 0, %v418
        %v420 = vrot.slane %v410, %v419
        %v421 = vlaneseq
        %v422 = vshrl.u32 %v421, 7
        %v423 = vsub.s32 0, %v422
        %v424 = vrot.slane %v414, %v423
        %v425 = vmul.f32 %v404, %v420
        %v426 = vmul.f32 %v404, %v424
        %v427 = vadd.f32 %v399, %v425
        %v428 = vadd.f32 %v400, %v426
        %429 = vset.pattern.permute.xlu0 1
        %430 = vperm.xlu0 %429, %v371
        %v431 = vpop.permute.xlu0 %430
        %v433 = vlaneseq
        %v434 = vshrl.u32 %v433, 7
        %v435 = vsub.s32 1, %v434
        %v436 = vrot.slane %v369, %v435
        %v437 = vlaneseq
        %v438 = vshrl.u32 %v437, 7
        %v439 = vsub.s32 5, %v438
        %v440 = vrot.slane %v369, %v439
        %v443 = vlaneseq
        %v444 = vshrl.u32 %v443, 7
        %v445 = vsub.s32 1, %v444
        %v446 = vrot.slane %v436, %v445
        %v447 = vlaneseq
        %v448 = vshrl.u32 %v447, 7
        %v449 = vsub.s32 1, %v448
        %v450 = vrot.slane %v440, %v449
        %v451 = vmul.f32 %v431, %v446
        %v452 = vmul.f32 %v431, %v450
        %v453 = vadd.f32 %v427, %v451
        %v454 = vadd.f32 %v428, %v452
        %455 = vset.pattern.permute.xlu0 2
        %456 = vperm.xlu0 %455, %v371
        %v457 = vpop.permute.xlu0 %456
        %v459 = vlaneseq
        %v460 = vshrl.u32 %v459, 7
        %v461 = vsub.s32 2, %v460
        %v462 = vrot.slane %v369, %v461
        %v463 = vlaneseq
        %v464 = vshrl.u32 %v463, 7
        %v465 = vsub.s32 6, %v464
        %v466 = vrot.slane %v369, %v465
        %v469 = vlaneseq
        %v470 = vshrl.u32 %v469, 7
        %v471 = vsub.s32 2, %v470
        %v472 = vrot.slane %v462, %v471
        %v473 = vlaneseq
        %v474 = vshrl.u32 %v473, 7
        %v475 = vsub.s32 2, %v474
        %v476 = vrot.slane %v466, %v475
        %v477 = vmul.f32 %v457, %v472
        %v478 = vmul.f32 %v457, %v476
        %v479 = vadd.f32 %v453, %v477
        %v480 = vadd.f32 %v454, %v478
        %481 = vset.pattern.permute.xlu0 3
        %482 = vperm.xlu0 %481, %v371
        %v483 = vpop.permute.xlu0 %482
        %v485 = vlaneseq
        %v486 = vshrl.u32 %v485, 7
        %v487 = vsub.s32 3, %v486
        %v488 = vrot.slane %v369, %v487
        %v489 = vlaneseq
        %v490 = vshrl.u32 %v489, 7
        %v491 = vsub.s32 7, %v490
        %v492 = vrot.slane %v369, %v491
        %v495 = vlaneseq
        %v496 = vshrl.u32 %v495, 7
        %v497 = vsub.s32 3, %v496
        %v498 = vrot.slane %v488, %v497
        %v499 = vlaneseq
        %v500 = vshrl.u32 %v499, 7
        %v501 = vsub.s32 3, %v500
        %v502 = vrot.slane %v492, %v501
        %v503 = vmul.f32 %v483, %v498
        %v504 = vmul.f32 %v483, %v502
        %v505 = vadd.f32 %v479, %v503
        %v506 = vadd.f32 %v480, %v504
        %v507 = vmax.f32 %v505, 0.0
        %v508 = vmax.f32 %v506, 0.0
        %510 = vset.pattern.permute.xlu0 0
        %511 = vperm.xlu0 %510, %v374
        %v512 = vpop.permute.xlu0 %511
        %v514 = vmul.f32 %v512, %v507
        %v515 = vmul.f32 %v512, %v508
        %vm516 = vcmask 1044480
        %v517 = vsel %vm516, %v514, 0.0
        %v518 = vrot.slane %v517, 4
        %v519 = vadd.f32 %v517, %v518
        %v520 = vrot.slane %v519, 2
        %v521 = vadd.f32 %v519, %v520
        %v522 = vrot.slane %v521, 1
        %v523 = vadd.f32 %v521, %v522
        %v524 = vsel %vm516, %v515, 0.0
        %v525 = vrot.slane %v524, 4
        %v526 = vadd.f32 %v524, %v525
        %v527 = vrot.slane %v526, 2
        %v528 = vadd.f32 %v526, %v527
        %v529 = vrot.slane %v528, 1
        %v530 = vadd.f32 %v528, %v529
        %s531 = sld [smem:[#allocation2]]
        %v532 = vstv %s531
        %v533 = vadd.f32 %v523, %v532
        %v534 = vadd.f32 %v530, %v532
        %v535 = vsub.f32 0.0, %v533
        %v536 = vsub.f32 0.0, %v534
        %v537 = vmul.f32 %v535, 1.442695
        %v538 = vpow.pop %v537
        %v539 = vmul.f32 %v536, 1.442695
        %v540 = vpow.pop %v539
        %v541 = vadd.f32 %v538, 1.0
        %v542 = vadd.f32 %v540, 1.0
        %v543 = vrcp.pop %v541
        %v544 = vrcp.pop %v542
        %546 = vset.pattern.permute.xlu0 0
        %547 = vperm.xlu0 %546, %v375
        %v548 = vpop.permute.xlu0 %547
        %v550 = vmul.f32 %v548, %v420
        %v551 = vmul.f32 %v548, %v424
        %552 = vset.pattern.permute.xlu0 1
        %553 = vperm.xlu0 %552, %v375
        %v554 = vpop.permute.xlu0 %553
        %v556 = vmul.f32 %v554, %v446
        %v557 = vmul.f32 %v554, %v450
        %v558 = vadd.f32 %v550, %v556
        %v559 = vadd.f32 %v551, %v557
        %560 = vset.pattern.permute.xlu0 2
        %561 = vperm.xlu0 %560, %v375
        %v562 = vpop.permute.xlu0 %561
        %v564 = vmul.f32 %v562, %v472
        %v565 = vmul.f32 %v562, %v476
        %v566 = vadd.f32 %v558, %v564
        %v567 = vadd.f32 %v559, %v565
        %568 = vset.pattern.permute.xlu0 3
        %569 = vperm.xlu0 %568, %v375
        %v570 = vpop.permute.xlu0 %569
        %v572 = vmul.f32 %v570, %v498
        %v573 = vmul.f32 %v570, %v502
        %v574 = vadd.f32 %v566, %v572
        %v575 = vadd.f32 %v567, %v573
        %v576 = vadd.f32 %v543, 1.0
        %v577 = vadd.f32 %v544, 1.0
        %v578 = vmul.f32 %v574, %v576
        %v579 = vmul.f32 %v575, %v577
        %580 = vst [vmem:[%s348] sm:$0xff] %v578
        %581 = vst [vmem:[%s348 + $0x8] sm:$0xff] %v579
        %s582 = sand.u32 %s227, 1
        %s583 = scalar_lea.sflag [#allocation4], %s582
        %s584 = sand.u32 %s227, 1
        %s585 = smul.addr %s584, 16
        %s586 = scalar_lea.vmem [#allocation3], %s585
        // Predicated region
        $region53: #{tpu_custom_call.1} parent=51 // pred_check
          %p587 = pneg %p237
        $region54: #{tpu_custom_call.1} parent=51 // pred_check_branch
          %589 = sbr.rel (%p587) target = $region56
        $region55: #{tpu_custom_call.1} parent=51 // pred_region
          %s590 = smul.u32 2, %s28
          %s592 = ssub.s32 256, 256
          %593 = vsyncadd %s583, %s592
          %s594 = smul.addr %s27, 2
          %s595 = sadd.s32 %s590, %s594
          %s596 = smul.addr %s595, 128
          %s597 = scalar_lea.hbm %s8, %s596
          %s599 = sshll.u32 %s586, 4
          %s600 = int_to_ptr.vmem [resolvable:$true] %s599
          %602 = dma.vmem_to_hbm [thread:$0]  %s600, 256, %s597, %s583
        $region56: #{tpu_custom_call.1} parent=51 // pred_fallthru
          _
      $region52: #{tpu_custom_call.1} parent=5 // pred_fallthru
        _
      %p603 = scmp.le.s32.totalorder 2, %s18
      // Predicated region
      $region57: #{tpu_custom_call.1} parent=5 // pred_check
        %p604 = pneg %p603
      $region58: #{tpu_custom_call.1} parent=5 // pred_check_branch
        %606 = sbr.rel (%p604) target = $region60
      $region59: #{tpu_custom_call.1} parent=5 // pred_region
        %s607 = ssub.s32 %s18, 2
        // Predicated region
        $region61: #{tpu_custom_call.1} parent=59 // pred_check
          %p608 = pneg %p243
        $region62: #{tpu_custom_call.1} parent=59 // pred_check_branch
          %610 = sbr.rel (%p608) target = $region64
        $region63: #{tpu_custom_call.1} parent=59 // pred_region
          %s611 = sand.u32 %s228, 1
          %s612 = scalar_lea.sflag [#allocation4], %s611
          %s613 = sand.u32 %s228, 1
          %s614 = smul.addr %s613, 16
          %s615 = scalar_lea.vmem [#allocation3], %s614
          %616 = dma.done %s612, 256
        $region64: #{tpu_custom_call.1} parent=59 // pred_fallthru
          _
      $region60: #{tpu_custom_call.1} parent=5 // pred_fallthru
        _
    $region6: #{tpu_custom_call.1} parent=1 // loop_footer
      %s22 = sadd.s32 1, %s18
    $region7: #{tpu_custom_call.1} parent=1 // loop_footer_branch
      %17 = sbr.rel target = $region3
    $region8: #{tpu_custom_call.1} parent=1 // loop_exit
      _
    %617 = vsyncpa [#allocation4], 1
    %s618 = scalar_lea.sflag [#allocation4], 1
    %619 = vsyncpa %s618, 1

</llo_original>
